<compile_context>
chip_gen: v5e
topology: v5e:2x2
jax: 0.10.0
libtpu: 0.0.40
codegen_flags: <defaults>
</compile_context>

<pallas_src>
import functools
import math

import jax
import jax.numpy as jnp
from jax.experimental import pallas as pl
from jax.experimental.pallas import tpu as pltpu

_TARGET_BLOCK_BYTES = 1 << 20   # ~1 MiB per input stream per grid step


def _pick_block_h(h, w, esize):
    """Block height along H: a multiple of 8 that divides H (or full H)."""
    max_rows = max(1, _TARGET_BLOCK_BYTES // max(1, w * esize))
    if h <= max_rows:
        return h                                   # full H plane: always legal
    top = (min(max_rows, h) // 8) * 8
    for cand in range(top, 7, -8):
        if h % cand == 0:
            return cand
    return h                                       # see TODO(synk) above


def _bce_kept(x, y, x_hi, x_lo):
    """BCE-with-logits + base keep mask of the PyTorch module, on logits.

    y == 1 -> keep if sigmoid(x) <= thresh      <=>  x <= logit(thresh)
    y == 0 -> keep if sigmoid(x) >= 1 - thresh  <=>  x >= -logit(thresh)
    (two explicit branches so non-binary targets are never base-kept, exactly
     matching the torch masked-assignment semantics)
    """
    kept = ((y == 1.0) & (x <= x_hi)) | ((y == 0.0) & (x >= x_lo))
    ax = jnp.abs(x)
    # numerically stable: max(x,0) - x*y + log1p(exp(-|x|))
    bce = jnp.maximum(x, 0.0) - x * y + jnp.log1p(jnp.exp(-ax))
    return bce, kept, ax


# --------------------------------------------------------------------------- #
# Stage 1: base-mask masked-sum / masked-count over channel 0.
# --------------------------------------------------------------------------- #
def _stage1_kernel(x_ref, y_ref, sum_ref, cnt_ref, psum_ref, pcnt_ref, *,
                   x_hi, x_lo):
    h = pl.program_id(1)

    @pl.when(h == 0)
    def _init():
        psum_ref[...] = jnp.zeros_like(psum_ref)
        pcnt_ref[...] = jnp.zeros_like(pcnt_ref)

    x = x_ref[...].astype(jnp.float32)
    y = y_ref[...].astype(jnp.float32)
    bce, kept, _ = _bce_kept(x, y, x_hi, x_lo)
    keptf = kept.astype(jnp.float32)

    # small (1, W) partial accumulators: no full-block accumulator RMW per step
    psum_ref[...] += jnp.sum(bce * keptf, axis=0, keepdims=True)
    pcnt_ref[...] += jnp.sum(keptf, axis=0, keepdims=True)

    @pl.when(h == pl.num_programs(1) - 1)
    def _fin():
        sum_ref[...] = jnp.sum(psum_ref[...], keepdims=True)
        cnt_ref[...] = jnp.sum(pcnt_ref[...], keepdims=True)


# --------------------------------------------------------------------------- #
# Stage 2 (fallback, gated): mask = base-kept U { |x| <= tau }.
# --------------------------------------------------------------------------- #
def _stage2_kernel(tau_ref, x_ref, y_ref, sum_ref, cnt_ref, psum_ref, pcnt_ref,
                   *, x_hi, x_lo):
    h = pl.program_id(1)

    @pl.when(h == 0)
    def _init():
        psum_ref[...] = jnp.zeros_like(psum_ref)
        pcnt_ref[...] = jnp.zeros_like(pcnt_ref)

    x = x_ref[...].astype(jnp.float32)
    y = y_ref[...].astype(jnp.float32)
    bce, kept, ax = _bce_kept(x, y, x_hi, x_lo)
    mf = (kept | (ax <= tau_ref[0])).astype(jnp.float32)

    psum_ref[...] += jnp.sum(bce * mf, axis=0, keepdims=True)
    pcnt_ref[...] += jnp.sum(mf, axis=0, keepdims=True)

    @pl.when(h == pl.num_programs(1) - 1)
    def _fin():
        sum_ref[...] = jnp.sum(psum_ref[...], keepdims=True)
        cnt_ref[...] = jnp.sum(pcnt_ref[...], keepdims=True)


# --------------------------------------------------------------------------- #
# pallas_call wrappers (direct NCHW reads, channel 0 via index_map)
# --------------------------------------------------------------------------- #
def _common_specs(n, h, w, bh):
    grid = (n, pl.cdiv(h, bh))                    # bh divides h (or bh == h)
    tile = pl.BlockSpec((None, None, bh, w), lambda i, j: (i, 0, j, 0))
    outs = pl.BlockSpec((None, 1, 1), lambda i, j: (i, 0, 0))
    out_shape = [jax.ShapeDtypeStruct((n, 1, 1), jnp.float32),
                 jax.ShapeDtypeStruct((n, 1, 1), jnp.float32)]
    scratch = [pltpu.VMEM((1, w), jnp.float32),
               pltpu.VMEM((1, w), jnp.float32)]
    cparams = pltpu.CompilerParams(
        dimension_semantics=("parallel", "arbitrary"))
    return grid, tile, outs, out_shape, scratch, cparams


def _run_stage1(logits, target, bh, x_hi, x_lo):
    n, _, h, w = logits.shape
    grid, tile, outs, out_shape, scratch, cparams = _common_specs(n, h, w, bh)
    s, c = pl.pallas_call(
        functools.partial(_stage1_kernel, x_hi=x_hi, x_lo=x_lo),
        grid=grid,
        in_specs=[tile, tile],
        out_specs=[outs, outs],
        out_shape=out_shape,
        scratch_shapes=scratch,
        compiler_params=cparams,
    )(logits, target)
    return jnp.sum(s), jnp.sum(c)


def _run_stage2(tau, logits, target, bh, x_hi, x_lo):
    n, _, h, w = logits.shape
    grid, tile, outs, out_shape, scratch, cparams = _common_specs(n, h, w, bh)
    smem = pl.BlockSpec(memory_space=pltpu.MemorySpace.SMEM)
    s, c = pl.pallas_call(
        functools.partial(_stage2_kernel, x_hi=x_hi, x_lo=x_lo),
        grid=grid,
        in_specs=[smem, tile, tile],
        out_specs=[outs, outs],
        out_shape=out_shape,
        scratch_shapes=scratch,
        compiler_params=cparams,
    )(tau, logits, target)
    return jnp.sum(s), jnp.sum(c)


# --------------------------------------------------------------------------- #
# OHEMBCELoss forward
# --------------------------------------------------------------------------- #
def ohem_bce_loss(logits, target, thresh=0.7, min_kept=10000):
    """logits/target: NCHW. Scalar OHEM BCE-with-logits loss on channel 0."""
    n, c, h, w = logits.shape
    t = n * h * w
    min_kept = int(min_kept)

    th = min(max(float(thresh), 1e-6), 1.0 - 1e-6)
    x_hi = math.log(th) - math.log1p(-th)          # logit(thresh)
    x_lo = -x_hi                                   # logit(1 - thresh)

    esize = max(jnp.dtype(logits.dtype).itemsize,
                jnp.dtype(target.dtype).itemsize)
    bh = _pick_block_h(h, w, esize)

    sum_base, cnt_base = _run_stage1(logits, target, bh, x_hi, x_lo)

    def _base_loss(_):
        # safe divide: PyTorch would NaN on an empty kept set; return 0 instead
        return sum_base / jnp.maximum(cnt_base, 1.0)

    if min_kept <= 0:
        return _base_loss(None)

    k = min(min_kept, t)

    def _fallback_loss(_):
        # k-th smallest |x| over channel-0 logits (values only, no scatter);
        # only evaluated when the base mask is short (see TODO on histograms).
        absx = jnp.abs(logits[:, 0, :, :].astype(jnp.float32).reshape(-1))
        neg_vals, _ = jax.lax.top_k(-absx, k)
        tau = jnp.reshape(-neg_vals[k - 1], (1,)).astype(jnp.float32)
        s_fb, c_fb = _run_stage2(tau, logits, target, bh, x_hi, x_lo)
        return s_fb / jnp.maximum(c_fb, 1.0)

    return jax.lax.cond(cnt_base < jnp.float32(min_kept),
                        _fallback_loss, _base_loss, 0)


# --------------------------------------------------------------------------- #
# pure-JAX reference replicating the PyTorch module (for the self-test)
# --------------------------------------------------------------------------- #
def _ohem_bce_ref(logits, target, thresh, min_kept):
    x = logits[:, 0, :, :].astype(jnp.float32).reshape(-1)
    y = target[:, 0, :, :].astype(jnp.float32).reshape(-1)
    p = jax.nn.sigmoid(x)
    kept = ((y == 1.0) & (p <= thresh)) | ((y == 0.0) & (p >= 1.0 - thresh))
    if int(kept.sum()) < min_kept:
        kk = min(int(min_kept), x.shape[0])
        idx = jnp.argsort(jnp.abs(p - 0.5))[:kk]
        kept = kept.at[idx].set(True)
    keptf = kept.astype(jnp.float32)
    bce = jnp.maximum(x, 0.0) - x * y + jnp.log1p(jnp.exp(-jnp.abs(x)))
    return jnp.sum(bce * keptf) / jnp.maximum(jnp.sum(keptf), 1.0)


# --------------------------------------------------------------------------- #
if __name__ == "__main__":
    key = jax.random.PRNGKey(0)
    k1, k2 = jax.random.split(key)

    N, C, H, W = 2, 4, 16, 16
    logits = jax.random.normal(k1, (N, C, H, W), dtype=jnp.float32) * 2.0
    target = jax.random.bernoulli(k2, 0.5, (N, C, H, W)).astype(jnp.float32)

    # 1) min_kept > N*H*W: fallback path fires and keeps every channel-0 pixel.
    loss_fb = jax.jit(functools.partial(ohem_bce_loss,
                                        thresh=0.7, min_kept=10000))(logits, target)
    loss_fb = jax.block_until_ready(loss_fb)
    ref_fb = _ohem_bce_ref(logits, target, 0.7, 10000)
    assert jnp.allclose(loss_fb, ref_fb, atol=1e-5, rtol=1e-5), (loss_fb, ref_fb)

    # 2) small min_kept: base path (fallback gated off by lax.cond).
    loss_base = jax.jit(functools.partial(ohem_bce_loss,
                                          thresh=0.7, min_kept=16))(logits, target)
    loss_base = jax.block_until_ready(loss_base)
    ref_base = _ohem_bce_ref(logits, target, 0.7, 16)
    assert jnp.allclose(loss_base, ref_base, atol=1e-5, rtol=1e-5), (loss_base, ref_base)

    print("KERNEL_OK")
</pallas_src>

<mosaic_0001>
module attributes {stable_mosaic.version = 11 : i64} {
  func.func @_stage1_kernel(%arg0: i32, %arg1: i32, %arg2: memref<1x1x16x16xf32, #tpu.memory_space<vmem>>, %arg3: memref<1x1x16x16xf32, #tpu.memory_space<vmem>>, %arg4: memref<1x1x1xf32, #tpu.memory_space<vmem>>, %arg5: memref<1x1x1xf32, #tpu.memory_space<vmem>>, %arg6: memref<1x16xf32, #tpu.memory_space<vmem>>, %arg7: memref<1x16xf32, #tpu.memory_space<vmem>>) attributes {dimension_semantics = [#tpu.dimension_semantics<parallel>, #tpu.dimension_semantics<arbitrary>], iteration_bounds = array<i64: 2, 1>, scalar_prefetch = 0 : i64, scratch_operands = 2 : i64, tpu.core_type = #tpu.core_type<tc>, window_params = [{transform_indices = @transform_0, window_bounds = array<i64: 1, 1, 16, 16>}, {transform_indices = @transform_1, window_bounds = array<i64: 1, 1, 16, 16>}, {transform_indices = @transform_2, window_bounds = array<i64: 1, 1, 1>}, {transform_indices = @transform_3, window_bounds = array<i64: 1, 1, 1>}]} {
    %c0_i32 = arith.constant 0 : i32
    %0 = arith.cmpi eq, %arg1, %c0_i32 : i32
    %1 = arith.extui %0 : i1 to i32
    %c0_i32_0 = arith.constant 0 : i32
    %2 = arith.cmpi ne, %1, %c0_i32_0 : i32
    scf.if %2 {
      %cst_25 = arith.constant 0.000000e+00 : f32
      %44 = vector.broadcast %cst_25 : f32 to vector<1x16xf32>
      %c0_26 = arith.constant 0 : index
      %c0_27 = arith.constant 0 : index
      %45 = vector.load %arg6[%c0_26, %c0_27] : memref<1x16xf32, #tpu.memory_space<vmem>>, vector<1x16xf32>
      tpu.vector_store %arg6[%c0_26, %c0_27], %44 {strides = array<i32>} : memref<1x16xf32, #tpu.memory_space<vmem>>, vector<1x16xf32>,
      %cst_28 = arith.constant 0.000000e+00 : f32
      %46 = vector.broadcast %cst_28 : f32 to vector<1x16xf32>
      %c0_29 = arith.constant 0 : index
      %c0_30 = arith.constant 0 : index
      %47 = vector.load %arg7[%c0_29, %c0_30] : memref<1x16xf32, #tpu.memory_space<vmem>>, vector<1x16xf32>
      tpu.vector_store %arg7[%c0_29, %c0_30], %46 {strides = array<i32>} : memref<1x16xf32, #tpu.memory_space<vmem>>, vector<1x16xf32>,
    } else {
    }
    %c0 = arith.constant 0 : index
    %c0_1 = arith.constant 0 : index
    %c0_2 = arith.constant 0 : index
    %c0_3 = arith.constant 0 : index
    %3 = vector.load %arg2[%c0, %c0_1, %c0_2, %c0_3] : memref<1x1x16x16xf32, #tpu.memory_space<vmem>>, vector<1x1x16x16xf32>
    %4 = vector.shape_cast %3 : vector<1x1x16x16xf32> to vector<16x16xf32>
    %c0_4 = arith.constant 0 : index
    %c0_5 = arith.constant 0 : index
    %c0_6 = arith.constant 0 : index
    %c0_7 = arith.constant 0 : index
    %5 = vector.load %arg3[%c0_4, %c0_5, %c0_6, %c0_7] : memref<1x1x16x16xf32, #tpu.memory_space<vmem>>, vector<1x1x16x16xf32>
    %6 = vector.shape_cast %5 : vector<1x1x16x16xf32> to vector<16x16xf32>
    %cst = arith.constant 1.000000e+00 : f32
    %7 = vector.broadcast %cst : f32 to vector<16x16xf32>
    %8 = arith.cmpf oeq, %6, %7 : vector<16x16xf32>
    %cst_8 = arith.constant 0.847297847 : f32
    %9 = vector.broadcast %cst_8 : f32 to vector<16x16xf32>
    %10 = arith.cmpf ole, %4, %9 : vector<16x16xf32>
    %11 = arith.andi %8, %10 : vector<16x16xi1>
    %cst_9 = arith.constant 0.000000e+00 : f32
    %12 = vector.broadcast %cst_9 : f32 to vector<16x16xf32>
    %13 = arith.cmpf oeq, %6, %12 : vector<16x16xf32>
    %cst_10 = arith.constant -0.847297847 : f32
    %14 = vector.broadcast %cst_10 : f32 to vector<16x16xf32>
    %15 = arith.cmpf oge, %4, %14 : vector<16x16xf32>
    %16 = arith.andi %13, %15 : vector<16x16xi1>
    %17 = arith.ori %11, %16 : vector<16x16xi1>
    %18 = math.absf %4 : vector<16x16xf32>
    %cst_11 = arith.constant 0.000000e+00 : f32
    %19 = vector.broadcast %cst_11 : f32 to vector<16x16xf32>
    %20 = arith.maximumf %4, %19 : vector<16x16xf32>
    %21 = arith.mulf %4, %6 : vector<16x16xf32>
    %22 = arith.subf %20, %21 : vector<16x16xf32>
    %cst_12 = arith.constant 0.000000e+00 : f32
    %23 = vector.broadcast %cst_12 : f32 to vector<16x16xf32>
    %24 = arith.subf %23, %18 : vector<16x16xf32>
    %25 = math.exp %24 : vector<16x16xf32>
    %26 = math.log1p %25 : vector<16x16xf32>
    %27 = arith.addf %22, %26 : vector<16x16xf32>
    %28 = arith.extui %17 : vector<16x16xi1> to vector<16x16xi32>
    %29 = arith.sitofp %28 : vector<16x16xi32> to vector<16x16xf32>
    %c0_13 = arith.constant 0 : index
    %c0_14 = arith.constant 0 : index
    %30 = vector.load %arg6[%c0_13, %c0_14] : memref<1x16xf32, #tpu.memory_space<vmem>>, vector<1x16xf32>
    %31 = arith.mulf %27, %29 : vector<16x16xf32>
    %cst_15 = arith.constant dense<0.000000e+00> : vector<16xf32>
    %32 = vector.multi_reduction <add>, %31, %cst_15 [0] : vector<16x16xf32> to vector<16xf32>
    %33 = vector.shape_cast %32 : vector<16xf32> to vector<1x16xf32>
    %34 = arith.addf %30, %33 : vector<1x16xf32>
    %c0_16 = arith.constant 0 : index
    %c0_17 = arith.constant 0 : index
    %35 = vector.load %arg6[%c0_16, %c0_17] : memref<1x16xf32, #tpu.memory_space<vmem>>, vector<1x16xf32>
    tpu.vector_store %arg6[%c0_16, %c0_17], %34 {strides = array<i32>} : memref<1x16xf32, #tpu.memory_space<vmem>>, vector<1x16xf32>,
    %c0_18 = arith.constant 0 : index
    %c0_19 = arith.constant 0 : index
    %36 = vector.load %arg7[%c0_18, %c0_19] : memref<1x16xf32, #tpu.memory_space<vmem>>, vector<1x16xf32>
    %cst_20 = arith.constant dense<0.000000e+00> : vector<16xf32>
    %37 = vector.multi_reduction <add>, %29, %cst_20 [0] : vector<16x16xf32> to vector<16xf32>
    %38 = vector.shape_cast %37 : vector<16xf32> to vector<1x16xf32>
    %39 = arith.addf %36, %38 : vector<1x16xf32>
    %c0_21 = arith.constant 0 : index
    %c0_22 = arith.constant 0 : index
    %40 = vector.load %arg7[%c0_21, %c0_22] : memref<1x16xf32, #tpu.memory_space<vmem>>, vector<1x16xf32>
    tpu.vector_store %arg7[%c0_21, %c0_22], %39 {strides = array<i32>} : memref<1x16xf32, #tpu.memory_space<vmem>>, vector<1x16xf32>,
    %c0_i32_23 = arith.constant 0 : i32
    %41 = arith.cmpi eq, %arg1, %c0_i32_23 : i32
    %42 = arith.extui %41 : i1 to i32
    %c0_i32_24 = arith.constant 0 : i32
    %43 = arith.cmpi ne, %42, %c0_i32_24 : i32
    scf.if %43 {
      %c0_25 = arith.constant 0 : index
      %c0_26 = arith.constant 0 : index
      %44 = vector.load %arg6[%c0_25, %c0_26] : memref<1x16xf32, #tpu.memory_space<vmem>>, vector<1x16xf32>
      %45 = vector.shape_cast %44 : vector<1x16xf32> to vector<1x1x16xf32>
      %cst_27 = arith.constant dense<0.000000e+00> : vector<1xf32>
      %46 = vector.multi_reduction <add>, %45, %cst_27 [1, 2] : vector<1x1x16xf32> to vector<1xf32>
      %47 = vector.shape_cast %46 : vector<1xf32> to vector<1x1x1xf32>
      %48 = vector.extract %47[0, 0, 0] : f32 from vector<1x1x1xf32>
      %49 = vector.broadcast %48 : f32 to vector<1x1xf32>
      %c0_28 = arith.constant 0 : index
      %c0_29 = arith.constant 0 : index
      %c0_30 = arith.constant 0 : index
      %50 = vector.load %arg4[%c0_28, %c0_29, %c0_30] : memref<1x1x1xf32, #tpu.memory_space<vmem>>, vector<1x1x1xf32>
      %51 = vector.shape_cast %50 : vector<1x1x1xf32> to vector<1x1xf32>
      %52 = vector.shape_cast %49 : vector<1x1xf32> to vector<1x1x1xf32>
      tpu.vector_store %arg4[%c0_28, %c0_29, %c0_30], %52 {strides = array<i32>} : memref<1x1x1xf32, #tpu.memory_space<vmem>>, vector<1x1x1xf32>,
      %c0_31 = arith.constant 0 : index
      %c0_32 = arith.constant 0 : index
      %53 = vector.load %arg7[%c0_31, %c0_32] : memref<1x16xf32, #tpu.memory_space<vmem>>, vector<1x16xf32>
      %54 = vector.shape_cast %53 : vector<1x16xf32> to vector<1x1x16xf32>
      %cst_33 = arith.constant dense<0.000000e+00> : vector<1xf32>
      %55 = vector.multi_reduction <add>, %54, %cst_33 [1, 2] : vector<1x1x16xf32> to vector<1xf32>
      %56 = vector.shape_cast %55 : vector<1xf32> to vector<1x1x1xf32>
      %57 = vector.extract %56[0, 0, 0] : f32 from vector<1x1x1xf32>
      %58 = vector.broadcast %57 : f32 to vector<1x1xf32>
      %c0_34 = arith.constant 0 : index
      %c0_35 = arith.constant 0 : index
      %c0_36 = arith.constant 0 : index
      %59 = vector.load %arg5[%c0_34, %c0_35, %c0_36] : memref<1x1x1xf32, #tpu.memory_space<vmem>>, vector<1x1x1xf32>
      %60 = vector.shape_cast %59 : vector<1x1x1xf32> to vector<1x1xf32>
      %61 = vector.shape_cast %58 : vector<1x1xf32> to vector<1x1x1xf32>
      tpu.vector_store %arg5[%c0_34, %c0_35, %c0_36], %61 {strides = array<i32>} : memref<1x1x1xf32, #tpu.memory_space<vmem>>, vector<1x1x1xf32>,
    } else {
    }
    return
  }
  func.func @transform_0(%arg0: i32, %arg1: i32) -> (i32, i32, i32, i32) {
    %c0_i32 = arith.constant 0 : i32
    %c0_i32_0 = arith.constant 0 : i32
    %c0_i32_1 = arith.constant 0 : i32
    return %arg0, %c0_i32, %arg1, %c0_i32_0 : i32, i32, i32, i32
  }
  func.func @transform_1(%arg0: i32, %arg1: i32) -> (i32, i32, i32, i32) {
    %c0_i32 = arith.constant 0 : i32
    %c0_i32_0 = arith.constant 0 : i32
    %c0_i32_1 = arith.constant 0 : i32
    return %arg0, %c0_i32, %arg1, %c0_i32_0 : i32, i32, i32, i32
  }
  func.func @transform_2(%arg0: i32, %arg1: i32) -> (i32, i32, i32) {
    %c0_i32 = arith.constant 0 : i32
    %c0_i32_0 = arith.constant 0 : i32
    %c0_i32_1 = arith.constant 0 : i32
    return %arg0, %c0_i32, %c0_i32_0 : i32, i32, i32
  }
  func.func @transform_3(%arg0: i32, %arg1: i32) -> (i32, i32, i32) {
    %c0_i32 = arith.constant 0 : i32
    %c0_i32_0 = arith.constant 0 : i32
    %c0_i32_1 = arith.constant 0 : i32
    return %arg0, %c0_i32, %c0_i32_0 : i32, i32, i32
  }
}

module attributes {stable_mosaic.version = 11 : i64} {
  func.func @_stage2_kernel(%arg0: i32, %arg1: i32, %arg2: memref<1xf32, #tpu.memory_space<smem>>, %arg3: memref<1x1x16x16xf32, #tpu.memory_space<vmem>>, %arg4: memref<1x1x16x16xf32, #tpu.memory_space<vmem>>, %arg5: memref<1x1x1xf32, #tpu.memory_space<vmem>>, %arg6: memref<1x1x1xf32, #tpu.memory_space<vmem>>, %arg7: memref<1x16xf32, #tpu.memory_space<vmem>>, %arg8: memref<1x16xf32, #tpu.memory_space<vmem>>) attributes {dimension_semantics = [#tpu.dimension_semantics<parallel>, #tpu.dimension_semantics<arbitrary>], iteration_bounds = array<i64: 2, 1>, scalar_prefetch = 0 : i64, scratch_operands = 2 : i64, tpu.core_type = #tpu.core_type<tc>, window_params = [{transform_indices = @transform_0, window_bounds = array<i64: 1>}, {transform_indices = @transform_1, window_bounds = array<i64: 1, 1, 16, 16>}, {transform_indices = @transform_2, window_bounds = array<i64: 1, 1, 16, 16>}, {transform_indices = @transform_3, window_bounds = array<i64: 1, 1, 1>}, {transform_indices = @transform_4, window_bounds = array<i64: 1, 1, 1>}]} {
    %c0_i32 = arith.constant 0 : i32
    %0 = arith.cmpi eq, %arg1, %c0_i32 : i32
    %1 = arith.extui %0 : i1 to i32
    %c0_i32_0 = arith.constant 0 : i32
    %2 = arith.cmpi ne, %1, %c0_i32_0 : i32
    scf.if %2 {
      %cst_26 = arith.constant 0.000000e+00 : f32
      %48 = vector.broadcast %cst_26 : f32 to vector<1x16xf32>
      %c0_27 = arith.constant 0 : index
      %c0_28 = arith.constant 0 : index
      %49 = vector.load %arg7[%c0_27, %c0_28] : memref<1x16xf32, #tpu.memory_space<vmem>>, vector<1x16xf32>
      tpu.vector_store %arg7[%c0_27, %c0_28], %48 {strides = array<i32>} : memref<1x16xf32, #tpu.memory_space<vmem>>, vector<1x16xf32>,
      %cst_29 = arith.constant 0.000000e+00 : f32
      %50 = vector.broadcast %cst_29 : f32 to vector<1x16xf32>
      %c0_30 = arith.constant 0 : index
      %c0_31 = arith.constant 0 : index
      %51 = vector.load %arg8[%c0_30, %c0_31] : memref<1x16xf32, #tpu.memory_space<vmem>>, vector<1x16xf32>
      tpu.vector_store %arg8[%c0_30, %c0_31], %50 {strides = array<i32>} : memref<1x16xf32, #tpu.memory_space<vmem>>, vector<1x16xf32>,
    } else {
    }
    %c0 = arith.constant 0 : index
    %c0_1 = arith.constant 0 : index
    %c0_2 = arith.constant 0 : index
    %c0_3 = arith.constant 0 : index
    %3 = vector.load %arg3[%c0, %c0_1, %c0_2, %c0_3] : memref<1x1x16x16xf32, #tpu.memory_space<vmem>>, vector<1x1x16x16xf32>
    %4 = vector.shape_cast %3 : vector<1x1x16x16xf32> to vector<16x16xf32>
    %c0_4 = arith.constant 0 : index
    %c0_5 = arith.constant 0 : index
    %c0_6 = arith.constant 0 : index
    %c0_7 = arith.constant 0 : index
    %5 = vector.load %arg4[%c0_4, %c0_5, %c0_6, %c0_7] : memref<1x1x16x16xf32, #tpu.memory_space<vmem>>, vector<1x1x16x16xf32>
    %6 = vector.shape_cast %5 : vector<1x1x16x16xf32> to vector<16x16xf32>
    %cst = arith.constant 1.000000e+00 : f32
    %7 = vector.broadcast %cst : f32 to vector<16x16xf32>
    %8 = arith.cmpf oeq, %6, %7 : vector<16x16xf32>
    %cst_8 = arith.constant 0.847297847 : f32
    %9 = vector.broadcast %cst_8 : f32 to vector<16x16xf32>
    %10 = arith.cmpf ole, %4, %9 : vector<16x16xf32>
    %11 = arith.andi %8, %10 : vector<16x16xi1>
    %cst_9 = arith.constant 0.000000e+00 : f32
    %12 = vector.broadcast %cst_9 : f32 to vector<16x16xf32>
    %13 = arith.cmpf oeq, %6, %12 : vector<16x16xf32>
    %cst_10 = arith.constant -0.847297847 : f32
    %14 = vector.broadcast %cst_10 : f32 to vector<16x16xf32>
    %15 = arith.cmpf oge, %4, %14 : vector<16x16xf32>
    %16 = arith.andi %13, %15 : vector<16x16xi1>
    %17 = arith.ori %11, %16 : vector<16x16xi1>
    %18 = math.absf %4 : vector<16x16xf32>
    %cst_11 = arith.constant 0.000000e+00 : f32
    %19 = vector.broadcast %cst_11 : f32 to vector<16x16xf32>
    %20 = arith.maximumf %4, %19 : vector<16x16xf32>
    %21 = arith.mulf %4, %6 : vector<16x16xf32>
    %22 = arith.subf %20, %21 : vector<16x16xf32>
    %cst_12 = arith.constant 0.000000e+00 : f32
    %23 = vector.broadcast %cst_12 : f32 to vector<16x16xf32>
    %24 = arith.subf %23, %18 : vector<16x16xf32>
    %25 = math.exp %24 : vector<16x16xf32>
    %26 = math.log1p %25 : vector<16x16xf32>
    %27 = arith.addf %22, %26 : vector<16x16xf32>
    %c0_13 = arith.constant 0 : index
    %28 = memref.load %arg2[%c0_13] : memref<1xf32, #tpu.memory_space<smem>>
    %29 = vector.broadcast %28 : f32 to vector<16x16xf32>
    %30 = arith.cmpf ole, %18, %29 : vector<16x16xf32>
    %31 = arith.ori %17, %30 : vector<16x16xi1>
    %32 = arith.extui %31 : vector<16x16xi1> to vector<16x16xi32>
    %33 = arith.sitofp %32 : vector<16x16xi32> to vector<16x16xf32>
    %c0_14 = arith.constant 0 : index
    %c0_15 = arith.constant 0 : index
    %34 = vector.load %arg7[%c0_14, %c0_15] : memref<1x16xf32, #tpu.memory_space<vmem>>, vector<1x16xf32>
    %35 = arith.mulf %27, %33 : vector<16x16xf32>
    %cst_16 = arith.constant dense<0.000000e+00> : vector<16xf32>
    %36 = vector.multi_reduction <add>, %35, %cst_16 [0] : vector<16x16xf32> to vector<16xf32>
    %37 = vector.shape_cast %36 : vector<16xf32> to vector<1x16xf32>
    %38 = arith.addf %34, %37 : vector<1x16xf32>
    %c0_17 = arith.constant 0 : index
    %c0_18 = arith.constant 0 : index
    %39 = vector.load %arg7[%c0_17, %c0_18] : memref<1x16xf32, #tpu.memory_space<vmem>>, vector<1x16xf32>
    tpu.vector_store %arg7[%c0_17, %c0_18], %38 {strides = array<i32>} : memref<1x16xf32, #tpu.memory_space<vmem>>, vector<1x16xf32>,
    %c0_19 = arith.constant 0 : index
    %c0_20 = arith.constant 0 : index
    %40 = vector.load %arg8[%c0_19, %c0_20] : memref<1x16xf32, #tpu.memory_space<vmem>>, vector<1x16xf32>
    %cst_21 = arith.constant dense<0.000000e+00> : vector<16xf32>
    %41 = vector.multi_reduction <add>, %33, %cst_21 [0] : vector<16x16xf32> to vector<16xf32>
    %42 = vector.shape_cast %41 : vector<16xf32> to vector<1x16xf32>
    %43 = arith.addf %40, %42 : vector<1x16xf32>
    %c0_22 = arith.constant 0 : index
    %c0_23 = arith.constant 0 : index
    %44 = vector.load %arg8[%c0_22, %c0_23] : memref<1x16xf32, #tpu.memory_space<vmem>>, vector<1x16xf32>
    tpu.vector_store %arg8[%c0_22, %c0_23], %43 {strides = array<i32>} : memref<1x16xf32, #tpu.memory_space<vmem>>, vector<1x16xf32>,
    %c0_i32_24 = arith.constant 0 : i32
    %45 = arith.cmpi eq, %arg1, %c0_i32_24 : i32
    %46 = arith.extui %45 : i1 to i32
    %c0_i32_25 = arith.constant 0 : i32
    %47 = arith.cmpi ne, %46, %c0_i32_25 : i32
    scf.if %47 {
      %c0_26 = arith.constant 0 : index
      %c0_27 = arith.constant 0 : index
      %48 = vector.load %arg7[%c0_26, %c0_27] : memref<1x16xf32, #tpu.memory_space<vmem>>, vector<1x16xf32>
      %49 = vector.shape_cast %48 : vector<1x16xf32> to vector<1x1x16xf32>
      %cst_28 = arith.constant dense<0.000000e+00> : vector<1xf32>
      %50 = vector.multi_reduction <add>, %49, %cst_28 [1, 2] : vector<1x1x16xf32> to vector<1xf32>
      %51 = vector.shape_cast %50 : vector<1xf32> to vector<1x1x1xf32>
      %52 = vector.extract %51[0, 0, 0] : f32 from vector<1x1x1xf32>
      %53 = vector.broadcast %52 : f32 to vector<1x1xf32>
      %c0_29 = arith.constant 0 : index
      %c0_30 = arith.constant 0 : index
      %c0_31 = arith.constant 0 : index
      %54 = vector.load %arg5[%c0_29, %c0_30, %c0_31] : memref<1x1x1xf32, #tpu.memory_space<vmem>>, vector<1x1x1xf32>
      %55 = vector.shape_cast %54 : vector<1x1x1xf32> to vector<1x1xf32>
      %56 = vector.shape_cast %53 : vector<1x1xf32> to vector<1x1x1xf32>
      tpu.vector_store %arg5[%c0_29, %c0_30, %c0_31], %56 {strides = array<i32>} : memref<1x1x1xf32, #tpu.memory_space<vmem>>, vector<1x1x1xf32>,
      %c0_32 = arith.constant 0 : index
      %c0_33 = arith.constant 0 : index
      %57 = vector.load %arg8[%c0_32, %c0_33] : memref<1x16xf32, #tpu.memory_space<vmem>>, vector<1x16xf32>
      %58 = vector.shape_cast %57 : vector<1x16xf32> to vector<1x1x16xf32>
      %cst_34 = arith.constant dense<0.000000e+00> : vector<1xf32>
      %59 = vector.multi_reduction <add>, %58, %cst_34 [1, 2] : vector<1x1x16xf32> to vector<1xf32>
      %60 = vector.shape_cast %59 : vector<1xf32> to vector<1x1x1xf32>
      %61 = vector.extract %60[0, 0, 0] : f32 from vector<1x1x1xf32>
      %62 = vector.broadcast %61 : f32 to vector<1x1xf32>
      %c0_35 = arith.constant 0 : index
      %c0_36 = arith.constant 0 : index
      %c0_37 = arith.constant 0 : index
      %63 = vector.load %arg6[%c0_35, %c0_36, %c0_37] : memref<1x1x1xf32, #tpu.memory_space<vmem>>, vector<1x1x1xf32>
      %64 = vector.shape_cast %63 : vector<1x1x1xf32> to vector<1x1xf32>
      %65 = vector.shape_cast %62 : vector<1x1xf32> to vector<1x1x1xf32>
      tpu.vector_store %arg6[%c0_35, %c0_36, %c0_37], %65 {strides = array<i32>} : memref<1x1x1xf32, #tpu.memory_space<vmem>>, vector<1x1x1xf32>,
    } else {
    }
    return
  }
  func.func @transform_0(%arg0: i32, %arg1: i32) -> i32 {
    %c0_i32 = arith.constant 0 : i32
    %c0_i32_0 = arith.constant 0 : i32
    return %c0_i32 : i32
  }
  func.func @transform_1(%arg0: i32, %arg1: i32) -> (i32, i32, i32, i32) {
    %c0_i32 = arith.constant 0 : i32
    %c0_i32_0 = arith.constant 0 : i32
    %c0_i32_1 = arith.constant 0 : i32
    return %arg0, %c0_i32, %arg1, %c0_i32_0 : i32, i32, i32, i32
  }
  func.func @transform_2(%arg0: i32, %arg1: i32) -> (i32, i32, i32, i32) {
    %c0_i32 = arith.constant 0 : i32
    %c0_i32_0 = arith.constant 0 : i32
    %c0_i32_1 = arith.constant 0 : i32
    return %arg0, %c0_i32, %arg1, %c0_i32_0 : i32, i32, i32, i32
  }
  func.func @transform_3(%arg0: i32, %arg1: i32) -> (i32, i32, i32) {
    %c0_i32 = arith.constant 0 : i32
    %c0_i32_0 = arith.constant 0 : i32
    %c0_i32_1 = arith.constant 0 : i32
    return %arg0, %c0_i32, %c0_i32_0 : i32, i32, i32
  }
  func.func @transform_4(%arg0: i32, %arg1: i32) -> (i32, i32, i32) {
    %c0_i32 = arith.constant 0 : i32
    %c0_i32_0 = arith.constant 0 : i32
    %c0_i32_1 = arith.constant 0 : i32
    return %arg0, %c0_i32, %c0_i32_0 : i32, i32, i32
  }
}

</mosaic_0001>

<llo_original>
// kernel: ohem_bce_loss.1
$region0: #{ohem_bce_loss.1}
  #allocation0 [shape = 'u32[]', space=smem, size = 0x4, offset = 0x4, fixed_abs, tag = 'smem constant byte address 0x4 - core index']
  #allocation1 [shape = 'u32[72,128]{1,0:T(1,128)}', space=vmem, size = 0x9000, scoped, tag = 'internal scratch']
  #allocation2 [shape = 'f32[1,16]{1,0:T(1,128)}', space=vmem, size = 0x200, scoped, tag = 'scratch operand']
  #allocation3 [shape = 'f32[1,16]{1,0:T(1,128)}', space=vmem, size = 0x200, scoped, tag = 'scratch operand']
  %s0 = inlined_call_operand.hbm [shape: f32[2,4,16,16], index: 0, kind: input, shape index: {}]
  %s1 = inlined_call_operand.hbm [shape: f32[2,4,16,16], index: 1, kind: input, shape index: {}]
  %s2 = inlined_call_operand.vmem [shape: f32[2,1,1], index: 2, kind: output, shape index: {0}]
  %s3 = inlined_call_operand.vmem [shape: f32[2,1,1], index: 3, kind: output, shape index: {1}]
  %4 = xla_tuple %s2, %s3
  %s5 = sld [smem:[#allocation0]]
  $region65: #{ohem_bce_loss.1} parent=0
    _
  %s7 = ssub.s32 1, %s5
  %s8 = scalar_select 0, %s7, %s5
  $region1: #{ohem_bce_loss.1} parent=0
    #allocation4 [shape = 'u8[16384]{0}', space=vmem, size = 0x4000, scoped, tag = 'input window, operand 0']
    #allocation5 [shape = 's32[2]{0}', space=sflag, size = 0x8, scoped, tag = 'scoped memory for ohem_bce_loss.1']
    #allocation6 [shape = 'u8[16384]{0}', space=vmem, size = 0x4000, scoped, tag = 'input window, operand 1']
    #allocation7 [shape = 's32[2]{0}', space=sflag, size = 0x8, scoped, tag = 'scoped memory for ohem_bce_loss.1']
    %9 = vsyncpa [#allocation5], 0
    %s10 = scalar_lea.sflag [#allocation5], 1
    %11 = vsyncpa %s10, 0
    %12 = vsyncpa [#allocation7], 0
    %s13 = scalar_lea.sflag [#allocation7], 1
    %14 = vsyncpa %s13, 0
    loop: start=0, step=1, limit=4
    $region2: #{ohem_bce_loss.1} parent=1 // loop_pre_header
      _
    $region3: #{ohem_bce_loss.1} parent=1 // loop_header
      %s16 = sphi 0, %s20
      %p17 = scmp.ge.s32.totalorder %s16, 4
      %s23 = sphi 0, %s35
      %s24 = sphi 0, %s31
      %s25 = sphi 0, %s23
      %s26 = sphi 0, %s24
      %s27 = sphi 0, %s25
      %s28 = sphi 0, %s26
      %s40 = sphi 0, %s42
      %s43 = sphi 0, %s40
      %s44 = sphi 0, %s43
      %s60 = sphi 0, %s44
      %s68 = sphi 0, %s70
      %s71 = sphi 0, %s68
      %s72 = sphi 0, %s71
      %s88 = sphi 0, %s72
      %s94 = sphi 0, %s96
      %s97 = sphi 0, %s94
      %s98 = sphi 0, %s97
      %s114 = sphi 0, %s98
      %s120 = sphi 0, %s122
      %s123 = sphi 0, %s120
      %s124 = sphi 0, %s123
      %s140 = sphi 0, %s124
    $region4: #{ohem_bce_loss.1} parent=1 // loop_header_branch
      %19 = sbr.rel (%p17) target = $region8
    $region5: #{ohem_bce_loss.1} parent=1 // loop_body
      %s21 = ssub.s32 %s16, 1
      %s22 = ssub.s32 %s16, 2
      %s29 = sadd.s32 1, %s24
      %p30 = scmp.ge.s32.totalorder %s29, 1
      %s31 = scalar_select %p30, 0, %s29
      %s32 = sadd.s32 1, %s23
      %s33 = scalar_select %p30, %s32, %s23
      %p34 = scmp.ge.s32.totalorder %s33, 2
      %s35 = scalar_select %p34, 0, %s33
      %s36 = ssub.s32 %s23, %s35
      %s37 = ssub.s32 %s24, %s31
      %s38 = sor.u32 %s36, %s37
      %p39 = scmp.eq.s32.totalorder %s38, 0
      %s41 = sadd.s32 %s40, 1
      %s42 = scalar_select %p39, %s40, %s41
      %p45 = pneg %p39
      %p46 = scmp.eq.s32.totalorder %s16, 1
      %p47 = por %p45, %p46
      %p48 = scmp.ne.s32.totalorder %s40, %s43
      %p49 = scmp.eq.s32.totalorder %s16, 0
      %p50 = por %p48, %p49
      %p51 = scmp.ne.s32.totalorder %s40, %s43
      %p52 = scmp.eq.s32.totalorder %s21, 1
      %p53 = por %p51, %p52
      %p54 = scmp.ne.s32.totalorder %s43, %s44
      %p55 = scmp.eq.s32.totalorder %s21, 0
      %p56 = por %p54, %p55
      %p57 = scmp.ne.s32.totalorder %s43, %s44
      %p58 = scmp.eq.s32.totalorder %s22, 1
      %p59 = por %p57, %p58
      %p61 = scmp.ne.s32.totalorder %s44, %s60
      %p62 = scmp.eq.s32.totalorder %s22, 0
      %p63 = por %p61, %p62
      %s64 = ssub.s32 %s23, %s35
      %s65 = ssub.s32 %s24, %s31
      %s66 = sor.u32 %s64, %s65
      %p67 = scmp.eq.s32.totalorder %s66, 0
      %s69 = sadd.s32 %s68, 1
      %s70 = scalar_select %p67, %s68, %s69
      %p73 = pneg %p67
      %p74 = scmp.eq.s32.totalorder %s16, 1
      %p75 = por %p73, %p74
      %p76 = scmp.ne.s32.totalorder %s68, %s71
      %p77 = scmp.eq.s32.totalorder %s16, 0
      %p78 = por %p76, %p77
      %p79 = scmp.ne.s32.totalorder %s68, %s71
      %p80 = scmp.eq.s32.totalorder %s21, 1
      %p81 = por %p79, %p80
      %p82 = scmp.ne.s32.totalorder %s71, %s72
      %p83 = scmp.eq.s32.totalorder %s21, 0
      %p84 = por %p82, %p83
      %p85 = scmp.ne.s32.totalorder %s71, %s72
      %p86 = scmp.eq.s32.totalorder %s22, 1
      %p87 = por %p85, %p86
      %p89 = scmp.ne.s32.totalorder %s72, %s88
      %p90 = scmp.eq.s32.totalorder %s22, 0
      %p91 = por %p89, %p90
      %s92 = ssub.s32 %s23, %s35
      %p93 = scmp.eq.s32.totalorder %s92, 0
      %s95 = sadd.s32 %s94, 1
      %s96 = scalar_select %p93, %s94, %s95
      %p99 = pneg %p93
      %p100 = scmp.eq.s32.totalorder %s16, 1
      %p101 = por %p99, %p100
      %p102 = scmp.ne.s32.totalorder %s94, %s97
      %p103 = scmp.eq.s32.totalorder %s16, 0
      %p104 = por %p102, %p103
      %p105 = scmp.ne.s32.totalorder %s94, %s97
      %p106 = scmp.eq.s32.totalorder %s21, 1
      %p107 = por %p105, %p106
      %p108 = scmp.ne.s32.totalorder %s97, %s98
      %p109 = scmp.eq.s32.totalorder %s21, 0
      %p110 = por %p108, %p109
      %p111 = scmp.ne.s32.totalorder %s97, %s98
      %p112 = scmp.eq.s32.totalorder %s22, 1
      %p113 = por %p111, %p112
      %p115 = scmp.ne.s32.totalorder %s98, %s114
      %p116 = scmp.eq.s32.totalorder %s22, 0
      %p117 = por %p115, %p116
      %s118 = ssub.s32 %s23, %s35
      %p119 = scmp.eq.s32.totalorder %s118, 0
      %s121 = sadd.s32 %s120, 1
      %s122 = scalar_select %p119, %s120, %s121
      %p125 = pneg %p119
      %p126 = scmp.eq.s32.totalorder %s16, 1
      %p127 = por %p125, %p126
      %p128 = scmp.ne.s32.totalorder %s120, %s123
      %p129 = scmp.eq.s32.totalorder %s16, 0
      %p130 = por %p128, %p129
      %p131 = scmp.ne.s32.totalorder %s120, %s123
      %p132 = scmp.eq.s32.totalorder %s21, 1
      %p133 = por %p131, %p132
      %p134 = scmp.ne.s32.totalorder %s123, %s124
      %p135 = scmp.eq.s32.totalorder %s21, 0
      %p136 = por %p134, %p135
      %p137 = scmp.ne.s32.totalorder %s123, %s124
      %p138 = scmp.eq.s32.totalorder %s22, 1
      %p139 = por %p137, %p138
      %p141 = scmp.ne.s32.totalorder %s124, %s140
      %p142 = scmp.eq.s32.totalorder %s22, 0
      %p143 = por %p141, %p142
      %p144 = scmp.le.s32.totalorder 1, %s16
      %p145 = scmp.lt.s32.totalorder %s16, 3
      %p146 = pnand %p144, %p145
      %p147 = pneg %p146
      // Predicated region
      $region9: #{ohem_bce_loss.1} parent=5 // pred_check
        _
      $region10: #{ohem_bce_loss.1} parent=5 // pred_check_branch
        %149 = sbr.rel (%p146) target = $region12
      $region11: #{ohem_bce_loss.1} parent=5 // pred_region
        %s150 = ssub.s32 %s16, 1
      $region12: #{ohem_bce_loss.1} parent=5 // pred_fallthru
        _
      %p151 = scmp.lt.s32.totalorder %s16, 2
      // Predicated region
      $region13: #{ohem_bce_loss.1} parent=5 // pred_check
        %p152 = pneg %p151
      $region14: #{ohem_bce_loss.1} parent=5 // pred_check_branch
        %154 = sbr.rel (%p152) target = $region16
      $region15: #{ohem_bce_loss.1} parent=5 // pred_region
        // Predicated region
        $region17: #{ohem_bce_loss.1} parent=15 // pred_check
          %p155 = pneg %p50
        $region18: #{ohem_bce_loss.1} parent=15 // pred_check_branch
          %157 = sbr.rel (%p155) target = $region20
        $region19: #{ohem_bce_loss.1} parent=15 // pred_region
          %s158 = sand.u32 %s40, 1
          %s159 = scalar_lea.sflag [#allocation5], %s158
          %s160 = sand.u32 %s40, 1
          %s161 = smul.addr %s160, 16
          %s162 = scalar_lea.vmem [#allocation4], %s161
          %s163 = smul.u32 2, %s24
          %165 = vsyncadd %s159, 0
          %s166 = smul.addr %s23, 8
          %s167 = sadd.s32 %s163, %s166
          %s168 = smul.addr %s167, 8
          %s169 = scalar_lea.hbm %s0, %s168
          %s170 = sshll.u32 %s169, 4
          %s171 = int_to_ptr.hbm [resolvable:$true] %s170
          %s172 = sshll.u32 %s162, 4
          %s173 = int_to_ptr.vmem [resolvable:$true] %s172
          %178 = dma.hbm_to_vmem [thread:$0]  %s171, 256, %s173, %s159, 128, 128, 8
        $region20: #{ohem_bce_loss.1} parent=15 // pred_fallthru
          _
        // Predicated region
        $region21: #{ohem_bce_loss.1} parent=15 // pred_check
          %p179 = pneg %p78
        $region22: #{ohem_bce_loss.1} parent=15 // pred_check_branch
          %181 = sbr.rel (%p179) target = $region24
        $region23: #{ohem_bce_loss.1} parent=15 // pred_region
          %s182 = sand.u32 %s68, 1
          %s183 = scalar_lea.sflag [#allocation7], %s182
          %s184 = sand.u32 %s68, 1
          %s185 = smul.addr %s184, 16
          %s186 = scalar_lea.vmem [#allocation6], %s185
          %s187 = smul.u32 2, %s24
          %189 = vsyncadd %s183, 0
          %s190 = smul.addr %s23, 8
          %s191 = sadd.s32 %s187, %s190
          %s192 = smul.addr %s191, 8
          %s193 = scalar_lea.hbm %s1, %s192
          %s194 = sshll.u32 %s193, 4
          %s195 = int_to_ptr.hbm [resolvable:$true] %s194
          %s196 = sshll.u32 %s186, 4
          %s197 = int_to_ptr.vmem [resolvable:$true] %s196
          %202 = dma.hbm_to_vmem [thread:$0]  %s195, 256, %s197, %s183, 128, 128, 8
        $region24: #{ohem_bce_loss.1} parent=15 // pred_fallthru
          _
      $region16: #{ohem_bce_loss.1} parent=5 // pred_fallthru
        _
      %p203 = scmp.le.s32.totalorder 1, %s16
      %p204 = scmp.lt.s32.totalorder %s16, 3
      %p205 = pnand %p203, %p204
      %p206 = pneg %p205
      // Predicated region
      $region25: #{ohem_bce_loss.1} parent=5 // pred_check
        _
      $region26: #{ohem_bce_loss.1} parent=5 // pred_check_branch
        %208 = sbr.rel (%p205) target = $region28
      $region27: #{ohem_bce_loss.1} parent=5 // pred_region
        %s209 = ssub.s32 %s16, 1
        %s210 = sand.u32 %s43, 1
        %s211 = scalar_lea.sflag [#allocation5], %s210
        %s212 = sand.u32 %s43, 1
        %s213 = smul.addr %s212, 16
        %s214 = scalar_lea.vmem [#allocation4], %s213
        // Predicated region
        $region29: #{ohem_bce_loss.1} parent=27 // pred_check
          %p215 = pneg %p56
        $region30: #{ohem_bce_loss.1} parent=27 // pred_check_branch
          %217 = sbr.rel (%p215) target = $region32
        $region31: #{ohem_bce_loss.1} parent=27 // pred_region
          %219 = dma.done %s211, 256
        $region32: #{ohem_bce_loss.1} parent=27 // pred_fallthru
          _
        %s220 = sand.u32 %s71, 1
        %s221 = scalar_lea.sflag [#allocation7], %s220
        %s222 = sand.u32 %s71, 1
        %s223 = smul.addr %s222, 16
        %s224 = scalar_lea.vmem [#allocation6], %s223
        // Predicated region
        $region33: #{ohem_bce_loss.1} parent=27 // pred_check
          %p225 = pneg %p84
        $region34: #{ohem_bce_loss.1} parent=27 // pred_check_branch
          %227 = sbr.rel (%p225) target = $region36
        $region35: #{ohem_bce_loss.1} parent=27 // pred_region
          %229 = dma.done %s221, 256
        $region36: #{ohem_bce_loss.1} parent=27 // pred_fallthru
          _
        %s230 = sand.u32 %s43, 1
        %s231 = scalar_lea.sflag [#allocation5], %s230
        %s232 = sand.u32 %s43, 1
        %s233 = smul.addr %s232, 16
        %s234 = scalar_lea.vmem [#allocation4], %s233
        %p235 = pneg %p56
        %p236 = pneg %p53
        %s237 = sand.u32 %s71, 1
        %s238 = scalar_lea.sflag [#allocation7], %s237
        %s239 = sand.u32 %s71, 1
        %s240 = smul.addr %s239, 16
        %s241 = scalar_lea.vmem [#allocation6], %s240
        %p242 = pneg %p84
        %p243 = pneg %p81
        %p244 = pneg %p110
        %p245 = pneg %p107
        %p246 = scmp.lt.s32.totalorder %s25, 1
        %s247 = scalar_select %p246, %s25, 1
        %s248 = scalar_lea.vmem %s2, %s247
        %p249 = pneg %p136
        %p250 = pneg %p133
        %p251 = scmp.lt.s32.totalorder %s25, 1
        %s252 = scalar_select %p251, %s25, 1
        %s253 = scalar_lea.vmem %s3, %s252
        %s254 = smul.u32 2, %s26
        %s255 = smul.u32 2, %s26
        %p256 = scmp.lt.s32.totalorder %s25, 1
        %s257 = scalar_select %p256, %s25, 1
        %s258 = scalar_lea.vmem %s2, %s257
        %p259 = scmp.lt.s32.totalorder %s25, 1
        %s260 = scalar_select %p259, %s25, 1
        %s261 = scalar_lea.vmem %s3, %s260
        %p262 = scmp.eq.s32.totalorder %s26, 0
        // Predicated region
        $region37: #{ohem_bce_loss.1} parent=27 // pred_check
          %p263 = pneg %p262
        $region38: #{ohem_bce_loss.1} parent=27 // pred_check_branch
          %265 = sbr.rel (%p263) target = $region40
        $region39: #{ohem_bce_loss.1} parent=27 // pred_region
          %vm266 = vcmask 122880
          %267 = vst.msk [vmem:[#allocation2] sm:$0x1] %vm266, 0.0
          %268 = vst.msk [vmem:[#allocation3] sm:$0x1] %vm266, 0.0
        $region40: #{ohem_bce_loss.1} parent=27 // pred_fallthru
          _
        %v269 = vld [vmem:[%s214] sm:$0xff]
        %v270 = vld [vmem:[%s214 + $0x8] sm:$0xff]
        %v271 = vld [vmem:[%s224] sm:$0xff]
        %v272 = vld [vmem:[%s224 + $0x8] sm:$0xff]
        %vm273 = vcmp.eq.f32.partialorder %v271, 1.0
        %vm274 = vcmp.eq.f32.partialorder %v272, 1.0
        %vm275 = vcmp.le.f32.partialorder %v269, 0.84729785
        %vm276 = vcmp.le.f32.partialorder %v270, 0.84729785
        %vm277 = vmand %vm273, %vm275
        %vm278 = vmand %vm274, %vm276
        %vm279 = vcmp.eq.f32.partialorder %v271, 0.0
        %vm280 = vcmp.eq.f32.partialorder %v272, 0.0
        %vm281 = vcmp.ge.f32.partialorder %v269, -0.84729785
        %vm282 = vcmp.ge.f32.partialorder %v270, -0.84729785
        %vm283 = vmand %vm279, %vm281
        %vm284 = vmand %vm280, %vm282
        %vm285 = vmor %vm277, %vm283
        %vm286 = vmor %vm278, %vm284
        %v287 = vand.u32 2147483647, %v269
        %v288 = vand.u32 2147483647, %v270
        %v289 = vmax.f32 %v269, 0.0
        %v290 = vmax.f32 %v270, 0.0
        %v291 = vmul.f32 %v269, %v271
        %v292 = vmul.f32 %v270, %v272
        %v293 = vsub.f32 %v289, %v291
        %v294 = vsub.f32 %v290, %v292
        %v295 = vsub.f32 0.0, %v287
        %v296 = vsub.f32 0.0, %v288
        %v297 = vmul.f32 %v295, 1.442695
        %v298 = vpow.pop %v297
        %v299 = vmul.f32 %v296, 1.442695
        %v300 = vpow.pop %v299
        %v301 = vadd.f32 %v298, 1.0
        %v302 = vlog2.pop %v301
        %v303 = vmul.f32 %v302, 0.6931472
        %v304 = vmul.f32 -0.5, %v298
        %v305 = vadd.f32 %v304, 1.0
        %v306 = vmul.f32 %v305, %v298
        %v307 = vand.u32 2147483647, %v298
        %vm308 = vcmp.lt.f32.partialorder %v307, 0.0004427343
        %v309 = vsel %vm308, %v306, %v303
        %v310 = vadd.f32 %v300, 1.0
        %v311 = vlog2.pop %v310
        %v312 = vmul.f32 %v311, 0.6931472
        %v313 = vmul.f32 -0.5, %v300
        %v314 = vadd.f32 %v313, 1.0
        %v315 = vmul.f32 %v314, %v300
        %v316 = vand.u32 2147483647, %v300
        %vm317 = vcmp.lt.f32.partialorder %v316, 0.0004427343
        %v318 = vsel %vm317, %v315, %v312
        %v319 = vadd.f32 %v293, %v309
        %v320 = vadd.f32 %v294, %v318
        %v321 = vsel %vm285, 1, 0
        %v322 = vsel %vm286, 1, 0
        %v323 = vcvt.s32.f32 %v321
        %v324 = vcvt.s32.f32 %v322
        %v325 = vld [vmem:[#allocation2] sm:$0x1]
        %v326 = vmul.f32 %v319, %v323
        %v327 = vmul.f32 %v320, %v324
        %vm328 = vcmask 130048
        %v329 = vsel %vm328, %v326, 0.0
        %v330 = vsel %vm328, %v327, 0.0
        %v331 = vadd.f32 %v329, %v330
        %v332 = vrot.slane %v331, 4
        %v333 = vadd.f32 %v331, %v332
        %v334 = vrot.slane %v333, 2
        %v335 = vadd.f32 %v333, %v334
        %v336 = vrot.slane %v335, 1
        %v337 = vadd.f32 %v335, %v336
        %v338 = vadd.f32 %v325, %v337
        %vm339 = vcmask 122880
        %340 = vst.msk [vmem:[#allocation2] sm:$0x1] %vm339, %v338
        %v341 = vld [vmem:[#allocation3] sm:$0x1]
        %v342 = vsel %vm328, %v323, 0.0
        %v343 = vsel %vm328, %v324, 0.0
        %v344 = vadd.f32 %v342, %v343
        %v345 = vrot.slane %v344, 4
        %v346 = vadd.f32 %v344, %v345
        %v347 = vrot.slane %v346, 2
        %v348 = vadd.f32 %v346, %v347
        %v349 = vrot.slane %v348, 1
        %v350 = vadd.f32 %v348, %v349
        %v351 = vadd.f32 %v341, %v350
        %352 = vst.msk [vmem:[#allocation3] sm:$0x1] %vm339, %v351
        // Predicated region
        $region41: #{ohem_bce_loss.1} parent=27 // pred_check
          %p353 = pneg %p262
        $region42: #{ohem_bce_loss.1} parent=27 // pred_check_branch
          %355 = sbr.rel (%p353) target = $region44
        $region43: #{ohem_bce_loss.1} parent=27 // pred_region
          %v356 = vld [vmem:[#allocation2] sm:$0x1]
          %v357 = vsel %vm339, %v356, 0.0
          %358 = vadd.xlane.f32.xlu0 %v357
          %v359 = vpop.xlane.xlu0 %358
          %v360 = vrot.slane %v359, 4
          %v361 = vadd.f32 %v359, %v360
          %v362 = vrot.slane %v361, 2
          %v363 = vadd.f32 %v361, %v362
          %v364 = vrot.slane %v363, 1
          %v365 = vadd.f32 %v363, %v364
          %s366 = vtos %v365
          %v367 = vstv %s366
          %vm368 = vcmask 0
          %369 = vst.msk [vmem:[%s258] sm:$0x1] %vm368, %v367
          %v370 = vld [vmem:[#allocation3] sm:$0x1]
          %v371 = vsel %vm339, %v370, 0.0
          %372 = vadd.xlane.f32.xlu0 %v371
          %v373 = vpop.xlane.xlu0 %372
          %v374 = vrot.slane %v373, 4
          %v375 = vadd.f32 %v373, %v374
          %v376 = vrot.slane %v375, 2
          %v377 = vadd.f32 %v375, %v376
          %v378 = vrot.slane %v377, 1
          %v379 = vadd.f32 %v377, %v378
          %s380 = vtos %v379
          %v381 = vstv %s380
          %382 = vst.msk [vmem:[%s261] sm:$0x1] %vm368, %v381
        $region44: #{ohem_bce_loss.1} parent=27 // pred_fallthru
          _
        %p383 = scmp.lt.s32.totalorder %s25, 1
        %s384 = scalar_select %p383, %s25, 1
        %s385 = scalar_lea.vmem %s2, %s384
        %p386 = scmp.lt.s32.totalorder %s25, 1
        %s387 = scalar_select %p386, %s25, 1
        %s388 = scalar_lea.vmem %s3, %s387
        // Predicated region
        $region45: #{ohem_bce_loss.1} parent=27 // pred_check
          %p389 = pneg %p107
        $region46: #{ohem_bce_loss.1} parent=27 // pred_check_branch
          %391 = sbr.rel (%p389) target = $region48
        $region47: #{ohem_bce_loss.1} parent=27 // pred_region
          _
        $region48: #{ohem_bce_loss.1} parent=27 // pred_fallthru
          _
        // Predicated region
        $region49: #{ohem_bce_loss.1} parent=27 // pred_check
          %p392 = pneg %p133
        $region50: #{ohem_bce_loss.1} parent=27 // pred_check_branch
          %394 = sbr.rel (%p392) target = $region52
        $region51: #{ohem_bce_loss.1} parent=27 // pred_region
          _
        $region52: #{ohem_bce_loss.1} parent=27 // pred_fallthru
          _
      $region28: #{ohem_bce_loss.1} parent=5 // pred_fallthru
        _
      %p395 = scmp.le.s32.totalorder 2, %s16
      // Predicated region
      $region53: #{ohem_bce_loss.1} parent=5 // pred_check
        %p396 = pneg %p395
      $region54: #{ohem_bce_loss.1} parent=5 // pred_check_branch
        %398 = sbr.rel (%p396) target = $region56
      $region55: #{ohem_bce_loss.1} parent=5 // pred_region
        %s399 = ssub.s32 %s16, 2
        // Predicated region
        $region57: #{ohem_bce_loss.1} parent=55 // pred_check
          %p400 = pneg %p113
        $region58: #{ohem_bce_loss.1} parent=55 // pred_check_branch
          %402 = sbr.rel (%p400) target = $region60
        $region59: #{ohem_bce_loss.1} parent=55 // pred_region
          %p403 = scmp.lt.s32.totalorder %s27, 1
          %s404 = scalar_select %p403, %s27, 1
          %s405 = scalar_lea.vmem %s2, %s404
        $region60: #{ohem_bce_loss.1} parent=55 // pred_fallthru
          _
        // Predicated region
        $region61: #{ohem_bce_loss.1} parent=55 // pred_check
          %p406 = pneg %p139
        $region62: #{ohem_bce_loss.1} parent=55 // pred_check_branch
          %408 = sbr.rel (%p406) target = $region64
        $region63: #{ohem_bce_loss.1} parent=55 // pred_region
          %p409 = scmp.lt.s32.totalorder %s27, 1
          %s410 = scalar_select %p409, %s27, 1
          %s411 = scalar_lea.vmem %s3, %s410
        $region64: #{ohem_bce_loss.1} parent=55 // pred_fallthru
          _
      $region56: #{ohem_bce_loss.1} parent=5 // pred_fallthru
        _
    $region6: #{ohem_bce_loss.1} parent=1 // loop_footer
      %s20 = sadd.s32 1, %s16
    $region7: #{ohem_bce_loss.1} parent=1 // loop_footer_branch
      %15 = sbr.rel target = $region3
    $region8: #{ohem_bce_loss.1} parent=1 // loop_exit
      _
    %412 = vsyncpa [#allocation5], 1
    %s413 = scalar_lea.sflag [#allocation5], 1
    %414 = vsyncpa %s413, 1
    %415 = vsyncpa [#allocation7], 1
    %s416 = scalar_lea.sflag [#allocation7], 1
    %417 = vsyncpa %s416, 1

// kernel: branch_1_fun.1
$region0: #{branch_1_fun.1}
  #allocation0 [shape = 'u32[]', space=smem, size = 0x4, offset = 0x4, fixed_abs, tag = 'smem constant byte address 0x4 - core index']
  #allocation1 [shape = 'u32[72,128]{1,0:T(1,128)}', space=vmem, size = 0x9000, scoped, tag = 'internal scratch']
  #allocation2 [shape = 'f32[1,16]{1,0:T(1,128)}', space=vmem, size = 0x200, scoped, tag = 'scratch operand']
  #allocation3 [shape = 'f32[1,16]{1,0:T(1,128)}', space=vmem, size = 0x200, scoped, tag = 'scratch operand']
  #allocation4 [shape = 'f32[1]{0:T(128)S(6)}', space=smem, size = 0x200, scoped, tag = 'scoped memory for branch_1_fun.1']
  %s0 = inlined_call_operand.<no memory space> [shape: f32[1], index: 0, kind: input, shape index: {}]
  %s1 = inlined_call_operand.hbm [shape: f32[2,4,16,16], index: 1, kind: input, shape index: {}]
  %s2 = inlined_call_operand.hbm [shape: f32[2,4,16,16], index: 2, kind: input, shape index: {}]
  %s3 = inlined_call_operand.vmem [shape: f32[2,1,1], index: 3, kind: output, shape index: {0}]
  %s4 = inlined_call_operand.vmem [shape: f32[2,1,1], index: 4, kind: output, shape index: {1}]
  %5 = xla_tuple %s3, %s4
  %s6 = sld [smem:[#allocation0]]
  $region69: #{branch_1_fun.1} parent=0
    _
  %s8 = ssub.s32 1, %s6
  %s9 = scalar_select 0, %s8, %s6
  %10 = sst [smem:[#allocation4]] %s0
  $region1: #{branch_1_fun.1} parent=0
    #allocation5 [shape = 'u8[16384]{0}', space=vmem, size = 0x4000, scoped, tag = 'input window, operand 1']
    #allocation6 [shape = 's32[2]{0}', space=sflag, size = 0x8, scoped, tag = 'scoped memory for branch_1_fun.1']
    #allocation7 [shape = 'u8[16384]{0}', space=vmem, size = 0x4000, scoped, tag = 'input window, operand 2']
    #allocation8 [shape = 's32[2]{0}', space=sflag, size = 0x8, scoped, tag = 'scoped memory for branch_1_fun.1']
    %11 = vsyncpa [#allocation6], 0
    %s12 = scalar_lea.sflag [#allocation6], 1
    %13 = vsyncpa %s12, 0
    %14 = vsyncpa [#allocation8], 0
    %s15 = scalar_lea.sflag [#allocation8], 1
    %16 = vsyncpa %s15, 0
    loop: start=0, step=1, limit=4
    $region2: #{branch_1_fun.1} parent=1 // loop_pre_header
      _
    $region3: #{branch_1_fun.1} parent=1 // loop_header
      %s18 = sphi 0, %s22
      %p19 = scmp.ge.s32.totalorder %s18, 4
      %s25 = sphi 0, %s37
      %s26 = sphi 0, %s33
      %s27 = sphi 0, %s25
      %s28 = sphi 0, %s26
      %s29 = sphi 0, %s27
      %s30 = sphi 0, %s28
      %s38 = sphi 0, %s38
      %s40 = sphi 0, %s38
      %s41 = sphi 0, %s40
      %s55 = sphi 0, %s41
      %s63 = sphi 0, %s65
      %s66 = sphi 0, %s63
      %s67 = sphi 0, %s66
      %s83 = sphi 0, %s67
      %s91 = sphi 0, %s93
      %s94 = sphi 0, %s91
      %s95 = sphi 0, %s94
      %s111 = sphi 0, %s95
      %s117 = sphi 0, %s119
      %s120 = sphi 0, %s117
      %s121 = sphi 0, %s120
      %s137 = sphi 0, %s121
      %s143 = sphi 0, %s145
      %s146 = sphi 0, %s143
      %s147 = sphi 0, %s146
      %s163 = sphi 0, %s147
    $region4: #{branch_1_fun.1} parent=1 // loop_header_branch
      %21 = sbr.rel (%p19) target = $region8
    $region5: #{branch_1_fun.1} parent=1 // loop_body
      %s23 = ssub.s32 %s18, 1
      %s24 = ssub.s32 %s18, 2
      %s31 = sadd.s32 1, %s26
      %p32 = scmp.ge.s32.totalorder %s31, 1
      %s33 = scalar_select %p32, 0, %s31
      %s34 = sadd.s32 1, %s25
      %s35 = scalar_select %p32, %s34, %s25
      %p36 = scmp.ge.s32.totalorder %s35, 2
      %s37 = scalar_select %p36, 0, %s35
      %s39 = sadd.s32 %s38, 1
      %p42 = scmp.eq.s32.totalorder %s18, 1
      %p43 = scmp.ne.s32.totalorder %s38, %s40
      %p44 = scmp.eq.s32.totalorder %s18, 0
      %p45 = por %p43, %p44
      %p46 = scmp.ne.s32.totalorder %s38, %s40
      %p47 = scmp.eq.s32.totalorder %s23, 1
      %p48 = por %p46, %p47
      %p49 = scmp.ne.s32.totalorder %s40, %s41
      %p50 = scmp.eq.s32.totalorder %s23, 0
      %p51 = por %p49, %p50
      %p52 = scmp.ne.s32.totalorder %s40, %s41
      %p53 = scmp.eq.s32.totalorder %s24, 1
      %p54 = por %p52, %p53
      %p56 = scmp.ne.s32.totalorder %s41, %s55
      %p57 = scmp.eq.s32.totalorder %s24, 0
      %p58 = por %p56, %p57
      %s59 = ssub.s32 %s25, %s37
      %s60 = ssub.s32 %s26, %s33
      %s61 = sor.u32 %s59, %s60
      %p62 = scmp.eq.s32.totalorder %s61, 0
      %s64 = sadd.s32 %s63, 1
      %s65 = scalar_select %p62, %s63, %s64
      %p68 = pneg %p62
      %p69 = scmp.eq.s32.totalorder %s18, 1
      %p70 = por %p68, %p69
      %p71 = scmp.ne.s32.totalorder %s63, %s66
      %p72 = scmp.eq.s32.totalorder %s18, 0
      %p73 = por %p71, %p72
      %p74 = scmp.ne.s32.totalorder %s63, %s66
      %p75 = scmp.eq.s32.totalorder %s23, 1
      %p76 = por %p74, %p75
      %p77 = scmp.ne.s32.totalorder %s66, %s67
      %p78 = scmp.eq.s32.totalorder %s23, 0
      %p79 = por %p77, %p78
      %p80 = scmp.ne.s32.totalorder %s66, %s67
      %p81 = scmp.eq.s32.totalorder %s24, 1
      %p82 = por %p80, %p81
      %p84 = scmp.ne.s32.totalorder %s67, %s83
      %p85 = scmp.eq.s32.totalorder %s24, 0
      %p86 = por %p84, %p85
      %s87 = ssub.s32 %s25, %s37
      %s88 = ssub.s32 %s26, %s33
      %s89 = sor.u32 %s87, %s88
      %p90 = scmp.eq.s32.totalorder %s89, 0
      %s92 = sadd.s32 %s91, 1
      %s93 = scalar_select %p90, %s91, %s92
      %p96 = pneg %p90
      %p97 = scmp.eq.s32.totalorder %s18, 1
      %p98 = por %p96, %p97
      %p99 = scmp.ne.s32.totalorder %s91, %s94
      %p100 = scmp.eq.s32.totalorder %s18, 0
      %p101 = por %p99, %p100
      %p102 = scmp.ne.s32.totalorder %s91, %s94
      %p103 = scmp.eq.s32.totalorder %s23, 1
      %p104 = por %p102, %p103
      %p105 = scmp.ne.s32.totalorder %s94, %s95
      %p106 = scmp.eq.s32.totalorder %s23, 0
      %p107 = por %p105, %p106
      %p108 = scmp.ne.s32.totalorder %s94, %s95
      %p109 = scmp.eq.s32.totalorder %s24, 1
      %p110 = por %p108, %p109
      %p112 = scmp.ne.s32.totalorder %s95, %s111
      %p113 = scmp.eq.s32.totalorder %s24, 0
      %p114 = por %p112, %p113
      %s115 = ssub.s32 %s25, %s37
      %p116 = scmp.eq.s32.totalorder %s115, 0
      %s118 = sadd.s32 %s117, 1
      %s119 = scalar_select %p116, %s117, %s118
      %p122 = pneg %p116
      %p123 = scmp.eq.s32.totalorder %s18, 1
      %p124 = por %p122, %p123
      %p125 = scmp.ne.s32.totalorder %s117, %s120
      %p126 = scmp.eq.s32.totalorder %s18, 0
      %p127 = por %p125, %p126
      %p128 = scmp.ne.s32.totalorder %s117, %s120
      %p129 = scmp.eq.s32.totalorder %s23, 1
      %p130 = por %p128, %p129
      %p131 = scmp.ne.s32.totalorder %s120, %s121
      %p132 = scmp.eq.s32.totalorder %s23, 0
      %p133 = por %p131, %p132
      %p134 = scmp.ne.s32.totalorder %s120, %s121
      %p135 = scmp.eq.s32.totalorder %s24, 1
      %p136 = por %p134, %p135
      %p138 = scmp.ne.s32.totalorder %s121, %s137
      %p139 = scmp.eq.s32.totalorder %s24, 0
      %p140 = por %p138, %p139
      %s141 = ssub.s32 %s25, %s37
      %p142 = scmp.eq.s32.totalorder %s141, 0
      %s144 = sadd.s32 %s143, 1
      %s145 = scalar_select %p142, %s143, %s144
      %p148 = pneg %p142
      %p149 = scmp.eq.s32.totalorder %s18, 1
      %p150 = por %p148, %p149
      %p151 = scmp.ne.s32.totalorder %s143, %s146
      %p152 = scmp.eq.s32.totalorder %s18, 0
      %p153 = por %p151, %p152
      %p154 = scmp.ne.s32.totalorder %s143, %s146
      %p155 = scmp.eq.s32.totalorder %s23, 1
      %p156 = por %p154, %p155
      %p157 = scmp.ne.s32.totalorder %s146, %s147
      %p158 = scmp.eq.s32.totalorder %s23, 0
      %p159 = por %p157, %p158
      %p160 = scmp.ne.s32.totalorder %s146, %s147
      %p161 = scmp.eq.s32.totalorder %s24, 1
      %p162 = por %p160, %p161
      %p164 = scmp.ne.s32.totalorder %s147, %s163
      %p165 = scmp.eq.s32.totalorder %s24, 0
      %p166 = por %p164, %p165
      %p167 = scmp.le.s32.totalorder 1, %s18
      %p168 = scmp.lt.s32.totalorder %s18, 3
      %p169 = pnand %p167, %p168
      %p170 = pneg %p169
      // Predicated region
      $region9: #{branch_1_fun.1} parent=5 // pred_check
        _
      $region10: #{branch_1_fun.1} parent=5 // pred_check_branch
        %172 = sbr.rel (%p169) target = $region12
      $region11: #{branch_1_fun.1} parent=5 // pred_region
        %s173 = ssub.s32 %s18, 1
        // Predicated region
        $region13: #{branch_1_fun.1} parent=11 // pred_check
          %p174 = pneg %p51
        $region14: #{branch_1_fun.1} parent=11 // pred_check_branch
          %176 = sbr.rel (%p174) target = $region16
        $region15: #{branch_1_fun.1} parent=11 // pred_region
          _
        $region16: #{branch_1_fun.1} parent=11 // pred_fallthru
          _
      $region12: #{branch_1_fun.1} parent=5 // pred_fallthru
        _
      %p177 = scmp.lt.s32.totalorder %s18, 2
      // Predicated region
      $region17: #{branch_1_fun.1} parent=5 // pred_check
        %p178 = pneg %p177
      $region18: #{branch_1_fun.1} parent=5 // pred_check_branch
        %180 = sbr.rel (%p178) target = $region20
      $region19: #{branch_1_fun.1} parent=5 // pred_region
        // Predicated region
        $region21: #{branch_1_fun.1} parent=19 // pred_check
          %p181 = pneg %p73
        $region22: #{branch_1_fun.1} parent=19 // pred_check_branch
          %183 = sbr.rel (%p181) target = $region24
        $region23: #{branch_1_fun.1} parent=19 // pred_region
          %s184 = sand.u32 %s63, 1
          %s185 = scalar_lea.sflag [#allocation6], %s184
          %s186 = sand.u32 %s63, 1
          %s187 = smul.addr %s186, 16
          %s188 = scalar_lea.vmem [#allocation5], %s187
          %s189 = smul.u32 2, %s26
          %191 = vsyncadd %s185, 0
          %s192 = smul.addr %s25, 8
          %s193 = sadd.s32 %s189, %s192
          %s194 = smul.addr %s193, 8
          %s195 = scalar_lea.hbm %s1, %s194
          %s196 = sshll.u32 %s195, 4
          %s197 = int_to_ptr.hbm [resolvable:$true] %s196
          %s198 = sshll.u32 %s188, 4
          %s199 = int_to_ptr.vmem [resolvable:$true] %s198
          %204 = dma.hbm_to_vmem [thread:$0]  %s197, 256, %s199, %s185, 128, 128, 8
        $region24: #{branch_1_fun.1} parent=19 // pred_fallthru
          _
        // Predicated region
        $region25: #{branch_1_fun.1} parent=19 // pred_check
          %p205 = pneg %p101
        $region26: #{branch_1_fun.1} parent=19 // pred_check_branch
          %207 = sbr.rel (%p205) target = $region28
        $region27: #{branch_1_fun.1} parent=19 // pred_region
          %s208 = sand.u32 %s91, 1
          %s209 = scalar_lea.sflag [#allocation8], %s208
          %s210 = sand.u32 %s91, 1
          %s211 = smul.addr %s210, 16
          %s212 = scalar_lea.vmem [#allocation7], %s211
          %s213 = smul.u32 2, %s26
          %215 = vsyncadd %s209, 0
          %s216 = smul.addr %s25, 8
          %s217 = sadd.s32 %s213, %s216
          %s218 = smul.addr %s217, 8
          %s219 = scalar_lea.hbm %s2, %s218
          %s220 = sshll.u32 %s219, 4
          %s221 = int_to_ptr.hbm [resolvable:$true] %s220
          %s222 = sshll.u32 %s212, 4
          %s223 = int_to_ptr.vmem [resolvable:$true] %s222
          %228 = dma.hbm_to_vmem [thread:$0]  %s221, 256, %s223, %s209, 128, 128, 8
        $region28: #{branch_1_fun.1} parent=19 // pred_fallthru
          _
      $region20: #{branch_1_fun.1} parent=5 // pred_fallthru
        _
      %p229 = scmp.le.s32.totalorder 1, %s18
      %p230 = scmp.lt.s32.totalorder %s18, 3
      %p231 = pnand %p229, %p230
      %p232 = pneg %p231
      // Predicated region
      $region29: #{branch_1_fun.1} parent=5 // pred_check
        _
      $region30: #{branch_1_fun.1} parent=5 // pred_check_branch
        %234 = sbr.rel (%p231) target = $region32
      $region31: #{branch_1_fun.1} parent=5 // pred_region
        %s235 = ssub.s32 %s18, 1
        %s236 = sand.u32 %s66, 1
        %s237 = scalar_lea.sflag [#allocation6], %s236
        %s238 = sand.u32 %s66, 1
        %s239 = smul.addr %s238, 16
        %s240 = scalar_lea.vmem [#allocation5], %s239
        // Predicated region
        $region33: #{branch_1_fun.1} parent=31 // pred_check
          %p241 = pneg %p79
        $region34: #{branch_1_fun.1} parent=31 // pred_check_branch
          %243 = sbr.rel (%p241) target = $region36
        $region35: #{branch_1_fun.1} parent=31 // pred_region
          %245 = dma.done %s237, 256
        $region36: #{branch_1_fun.1} parent=31 // pred_fallthru
          _
        %s246 = sand.u32 %s94, 1
        %s247 = scalar_lea.sflag [#allocation8], %s246
        %s248 = sand.u32 %s94, 1
        %s249 = smul.addr %s248, 16
        %s250 = scalar_lea.vmem [#allocation7], %s249
        // Predicated region
        $region37: #{branch_1_fun.1} parent=31 // pred_check
          %p251 = pneg %p107
        $region38: #{branch_1_fun.1} parent=31 // pred_check_branch
          %253 = sbr.rel (%p251) target = $region40
        $region39: #{branch_1_fun.1} parent=31 // pred_region
          %255 = dma.done %s247, 256
        $region40: #{branch_1_fun.1} parent=31 // pred_fallthru
          _
        %p256 = pneg %p51
        %p257 = pneg %p48
        %s258 = sand.u32 %s66, 1
        %s259 = scalar_lea.sflag [#allocation6], %s258
        %s260 = sand.u32 %s66, 1
        %s261 = smul.addr %s260, 16
        %s262 = scalar_lea.vmem [#allocation5], %s261
        %p263 = pneg %p79
        %p264 = pneg %p76
        %s265 = sand.u32 %s94, 1
        %s266 = scalar_lea.sflag [#allocation8], %s265
        %s267 = sand.u32 %s94, 1
        %s268 = smul.addr %s267, 16
        %s269 = scalar_lea.vmem [#allocation7], %s268
        %p270 = pneg %p107
        %p271 = pneg %p104
        %p272 = pneg %p133
        %p273 = pneg %p130
        %p274 = scmp.lt.s32.totalorder %s27, 1
        %s275 = scalar_select %p274, %s27, 1
        %s276 = scalar_lea.vmem %s3, %s275
        %p277 = pneg %p159
        %p278 = pneg %p156
        %p279 = scmp.lt.s32.totalorder %s27, 1
        %s280 = scalar_select %p279, %s27, 1
        %s281 = scalar_lea.vmem %s4, %s280
        %s282 = smul.u32 2, %s28
        %s283 = smul.u32 2, %s28
        %p284 = scmp.lt.s32.totalorder %s27, 1
        %s285 = scalar_select %p284, %s27, 1
        %s286 = scalar_lea.vmem %s3, %s285
        %p287 = scmp.lt.s32.totalorder %s27, 1
        %s288 = scalar_select %p287, %s27, 1
        %s289 = scalar_lea.vmem %s4, %s288
        %p290 = scmp.eq.s32.totalorder %s28, 0
        // Predicated region
        $region41: #{branch_1_fun.1} parent=31 // pred_check
          %p291 = pneg %p290
        $region42: #{branch_1_fun.1} parent=31 // pred_check_branch
          %293 = sbr.rel (%p291) target = $region44
        $region43: #{branch_1_fun.1} parent=31 // pred_region
          %vm294 = vcmask 122880
          %295 = vst.msk [vmem:[#allocation2] sm:$0x1] %vm294, 0.0
          %296 = vst.msk [vmem:[#allocation3] sm:$0x1] %vm294, 0.0
        $region44: #{branch_1_fun.1} parent=31 // pred_fallthru
          _
        %v297 = vld [vmem:[%s240] sm:$0xff]
        %v298 = vld [vmem:[%s240 + $0x8] sm:$0xff]
        %v299 = vld [vmem:[%s250] sm:$0xff]
        %v300 = vld [vmem:[%s250 + $0x8] sm:$0xff]
        %vm301 = vcmp.eq.f32.partialorder %v299, 1.0
        %vm302 = vcmp.eq.f32.partialorder %v300, 1.0
        %vm303 = vcmp.le.f32.partialorder %v297, 0.84729785
        %vm304 = vcmp.le.f32.partialorder %v298, 0.84729785
        %vm305 = vmand %vm301, %vm303
        %vm306 = vmand %vm302, %vm304
        %vm307 = vcmp.eq.f32.partialorder %v299, 0.0
        %vm308 = vcmp.eq.f32.partialorder %v300, 0.0
        %vm309 = vcmp.ge.f32.partialorder %v297, -0.84729785
        %vm310 = vcmp.ge.f32.partialorder %v298, -0.84729785
        %vm311 = vmand %vm307, %vm309
        %vm312 = vmand %vm308, %vm310
        %vm313 = vmor %vm305, %vm311
        %vm314 = vmor %vm306, %vm312
        %v315 = vand.u32 2147483647, %v297
        %v316 = vand.u32 2147483647, %v298
        %v317 = vmax.f32 %v297, 0.0
        %v318 = vmax.f32 %v298, 0.0
        %v319 = vmul.f32 %v297, %v299
        %v320 = vmul.f32 %v298, %v300
        %v321 = vsub.f32 %v317, %v319
        %v322 = vsub.f32 %v318, %v320
        %v323 = vsub.f32 0.0, %v315
        %v324 = vsub.f32 0.0, %v316
        %v325 = vmul.f32 %v323, 1.442695
        %v326 = vpow.pop %v325
        %v327 = vmul.f32 %v324, 1.442695
        %v328 = vpow.pop %v327
        %v329 = vadd.f32 %v326, 1.0
        %v330 = vlog2.pop %v329
        %v331 = vmul.f32 %v330, 0.6931472
        %v332 = vmul.f32 -0.5, %v326
        %v333 = vadd.f32 %v332, 1.0
        %v334 = vmul.f32 %v333, %v326
        %v335 = vand.u32 2147483647, %v326
        %vm336 = vcmp.lt.f32.partialorder %v335, 0.0004427343
        %v337 = vsel %vm336, %v334, %v331
        %v338 = vadd.f32 %v328, 1.0
        %v339 = vlog2.pop %v338
        %v340 = vmul.f32 %v339, 0.6931472
        %v341 = vmul.f32 -0.5, %v328
        %v342 = vadd.f32 %v341, 1.0
        %v343 = vmul.f32 %v342, %v328
        %v344 = vand.u32 2147483647, %v328
        %vm345 = vcmp.lt.f32.partialorder %v344, 0.0004427343
        %v346 = vsel %vm345, %v343, %v340
        %v347 = vadd.f32 %v321, %v337
        %v348 = vadd.f32 %v322, %v346
        %s349 = sld [smem:[#allocation4]]
        %v350 = vstv %s349
        %vm351 = vcmp.le.f32.partialorder %v315, %v350
        %vm352 = vcmp.le.f32.partialorder %v316, %v350
        %vm353 = vmor %vm313, %vm351
        %vm354 = vmor %vm314, %vm352
        %v355 = vsel %vm353, 1, 0
        %v356 = vsel %vm354, 1, 0
        %v357 = vcvt.s32.f32 %v355
        %v358 = vcvt.s32.f32 %v356
        %v359 = vld [vmem:[#allocation2] sm:$0x1]
        %v360 = vmul.f32 %v347, %v357
        %v361 = vmul.f32 %v348, %v358
        %vm362 = vcmask 130048
        %v363 = vsel %vm362, %v360, 0.0
        %v364 = vsel %vm362, %v361, 0.0
        %v365 = vadd.f32 %v363, %v364
        %v366 = vrot.slane %v365, 4
        %v367 = vadd.f32 %v365, %v366
        %v368 = vrot.slane %v367, 2
        %v369 = vadd.f32 %v367, %v368
        %v370 = vrot.slane %v369, 1
        %v371 = vadd.f32 %v369, %v370
        %v372 = vadd.f32 %v359, %v371
        %vm373 = vcmask 122880
        %374 = vst.msk [vmem:[#allocation2] sm:$0x1] %vm373, %v372
        %v375 = vld [vmem:[#allocation3] sm:$0x1]
        %v376 = vsel %vm362, %v357, 0.0
        %v377 = vsel %vm362, %v358, 0.0
        %v378 = vadd.f32 %v376, %v377
        %v379 = vrot.slane %v378, 4
        %v380 = vadd.f32 %v378, %v379
        %v381 = vrot.slane %v380, 2
        %v382 = vadd.f32 %v380, %v381
        %v383 = vrot.slane %v382, 1
        %v384 = vadd.f32 %v382, %v383
        %v385 = vadd.f32 %v375, %v384
        %386 = vst.msk [vmem:[#allocation3] sm:$0x1] %vm373, %v385
        // Predicated region
        $region45: #{branch_1_fun.1} parent=31 // pred_check
          %p387 = pneg %p290
        $region46: #{branch_1_fun.1} parent=31 // pred_check_branch
          %389 = sbr.rel (%p387) target = $region48
        $region47: #{branch_1_fun.1} parent=31 // pred_region
          %v390 = vld [vmem:[#allocation2] sm:$0x1]
          %v391 = vsel %vm373, %v390, 0.0
          %392 = vadd.xlane.f32.xlu0 %v391
          %v393 = vpop.xlane.xlu0 %392
          %v394 = vrot.slane %v393, 4
          %v395 = vadd.f32 %v393, %v394
          %v396 = vrot.slane %v395, 2
          %v397 = vadd.f32 %v395, %v396
          %v398 = vrot.slane %v397, 1
          %v399 = vadd.f32 %v397, %v398
          %s400 = vtos %v399
          %v401 = vstv %s400
          %vm402 = vcmask 0
          %403 = vst.msk [vmem:[%s286] sm:$0x1] %vm402, %v401
          %v404 = vld [vmem:[#allocation3] sm:$0x1]
          %v405 = vsel %vm373, %v404, 0.0
          %406 = vadd.xlane.f32.xlu0 %v405
          %v407 = vpop.xlane.xlu0 %406
          %v408 = vrot.slane %v407, 4
          %v409 = vadd.f32 %v407, %v408
          %v410 = vrot.slane %v409, 2
          %v411 = vadd.f32 %v409, %v410
          %v412 = vrot.slane %v411, 1
          %v413 = vadd.f32 %v411, %v412
          %s414 = vtos %v413
          %v415 = vstv %s414
          %416 = vst.msk [vmem:[%s289] sm:$0x1] %vm402, %v415
        $region48: #{branch_1_fun.1} parent=31 // pred_fallthru
          _
        %p417 = scmp.lt.s32.totalorder %s27, 1
        %s418 = scalar_select %p417, %s27, 1
        %s419 = scalar_lea.vmem %s3, %s418
        %p420 = scmp.lt.s32.totalorder %s27, 1
        %s421 = scalar_select %p420, %s27, 1
        %s422 = scalar_lea.vmem %s4, %s421
        // Predicated region
        $region49: #{branch_1_fun.1} parent=31 // pred_check
          %p423 = pneg %p130
        $region50: #{branch_1_fun.1} parent=31 // pred_check_branch
          %425 = sbr.rel (%p423) target = $region52
        $region51: #{branch_1_fun.1} parent=31 // pred_region
          _
        $region52: #{branch_1_fun.1} parent=31 // pred_fallthru
          _
        // Predicated region
        $region53: #{branch_1_fun.1} parent=31 // pred_check
          %p426 = pneg %p156
        $region54: #{branch_1_fun.1} parent=31 // pred_check_branch
          %428 = sbr.rel (%p426) target = $region56
        $region55: #{branch_1_fun.1} parent=31 // pred_region
          _
        $region56: #{branch_1_fun.1} parent=31 // pred_fallthru
          _
      $region32: #{branch_1_fun.1} parent=5 // pred_fallthru
        _
      %p429 = scmp.le.s32.totalorder 2, %s18
      // Predicated region
      $region57: #{branch_1_fun.1} parent=5 // pred_check
        %p430 = pneg %p429
      $region58: #{branch_1_fun.1} parent=5 // pred_check_branch
        %432 = sbr.rel (%p430) target = $region60
      $region59: #{branch_1_fun.1} parent=5 // pred_region
        %s433 = ssub.s32 %s18, 2
        // Predicated region
        $region61: #{branch_1_fun.1} parent=59 // pred_check
          %p434 = pneg %p136
        $region62: #{branch_1_fun.1} parent=59 // pred_check_branch
          %436 = sbr.rel (%p434) target = $region64
        $region63: #{branch_1_fun.1} parent=59 // pred_region
          %p437 = scmp.lt.s32.totalorder %s29, 1
          %s438 = scalar_select %p437, %s29, 1
          %s439 = scalar_lea.vmem %s3, %s438
        $region64: #{branch_1_fun.1} parent=59 // pred_fallthru
          _
        // Predicated region
        $region65: #{branch_1_fun.1} parent=59 // pred_check
          %p440 = pneg %p162
        $region66: #{branch_1_fun.1} parent=59 // pred_check_branch
          %442 = sbr.rel (%p440) target = $region68
        $region67: #{branch_1_fun.1} parent=59 // pred_region
          %p443 = scmp.lt.s32.totalorder %s29, 1
          %s444 = scalar_select %p443, %s29, 1
          %s445 = scalar_lea.vmem %s4, %s444
        $region68: #{branch_1_fun.1} parent=59 // pred_fallthru
          _
      $region60: #{branch_1_fun.1} parent=5 // pred_fallthru
        _
    $region6: #{branch_1_fun.1} parent=1 // loop_footer
      %s22 = sadd.s32 1, %s18
    $region7: #{branch_1_fun.1} parent=1 // loop_footer_branch
      %17 = sbr.rel target = $region3
    $region8: #{branch_1_fun.1} parent=1 // loop_exit
      _
    %446 = vsyncpa [#allocation6], 1
    %s447 = scalar_lea.sflag [#allocation6], 1
    %448 = vsyncpa %s447, 1
    %449 = vsyncpa [#allocation8], 1
    %s450 = scalar_lea.sflag [#allocation8], 1
    %451 = vsyncpa %s450, 1

</llo_original>
